<compile_context>
chip_gen: v6e
topology: v6e:2x2x1
jax: 0.10.0
libtpu: 0.0.40
codegen_flags: <defaults>
</compile_context>

<pallas_src>
import functools

import jax
import jax.numpy as jnp
from jax.experimental import pallas as pl
from jax.experimental.pallas import tpu as pltpu

BN_EPS = 1e-5


def _round_up(x, m):
    return (x + m - 1) // m * m


def conv_relu_pool_stats_kernel(x_ref, w_ref, pooled_ref, stats_ref):
    """Phase 1: 1x1 conv + ReLU + per-tile BN partial sums + 2x2 avg-pool (un-normalized).

    x_ref:      (4, tM, Cin_p)  bf16  -- 4 = (dh, dw) offsets of each 2x2 pooling window
    w_ref:      (Cin_p, Cout_p) bf16  -- 1x1 conv weight, transposed
    pooled_ref: (tM, Cout_p)    f32   -- mean over the 2x2 window (not yet BN-normalized)
    stats_ref:  (1, 2, Cout_p)  f32   -- row 0: sum(y), row 1: sum(y*y) for this tile
    """
    tm = x_ref.shape[1]
    cin = x_ref.shape[2]
    cout = pooled_ref.shape[1]

    # One large-M MXU matmul instead of 4 short latency-bound pushes.
    x2d = x_ref[...].reshape(4 * tm, cin)                              # tile-aligned collapse
    y = jnp.dot(x2d, w_ref[...], preferred_element_type=jnp.float32)   # (4*tM, Cout), f32 acc
    y = jnp.maximum(y, 0.0)                                            # ReLU (before BN, as in module)

    # Per-tile BN partial sums (single VPU pass over the fused result).
    s1 = jnp.sum(y, axis=0, keepdims=True)                             # (1, Cout)
    s2 = jnp.sum(y * y, axis=0, keepdims=True)                         # (1, Cout)
    stats_ref[:, 0:1, :] = s1.reshape(1, 1, cout)
    stats_ref[:, 1:2, :] = s2.reshape(1, 1, cout)

    # 2x2 average pool: add the 4 offset slabs (static, 8-aligned slices).
    pooled = y[0:tm, :]
    for k in range(1, 4):
        pooled = pooled + y[k * tm:(k + 1) * tm, :]
    pooled_ref[...] = 0.25 * pooled


def normalize_kernel(p_ref, scale_ref, shift_ref, o_ref):
    """Phase 2: apply the folded BatchNorm affine: out = pooled * scale + shift."""
    o_ref[...] = p_ref[...] * scale_ref[...] + shift_ref[...]


@functools.partial(jax.jit, static_argnames=("block_m",))
def transition_layer(x_nchw, conv_w, gamma, beta, block_m=512):
    """x_nchw: (N, Cin, H, W); conv_w: (Cout, Cin); returns (N, Cout, H//2, W//2) f32."""
    N, Cin, H, W = x_nchw.shape
    Cout = conv_w.shape[0]
    assert H % 2 == 0 and W % 2 == 0, "TransitionLayer kernel assumes even H, W"
    Ho, Wo = H // 2, W // 2
    M2 = N * Ho * Wo

    cin_p = _round_up(Cin, 128)           # lane-dense input channels / MXU K
    cout_p = _round_up(Cout, 128)         # lane-dense output channels (unmasked stores)
    tm = min(block_m, _round_up(M2, 8))   # rows per grid step (512 ~ HBM-roofline sweet spot)
    m2_p = _round_up(M2, tm)
    num_tiles = m2_p // tm

    # Single fused repack: NCHW -> (4, M2, Cin), offset-major / channels-last.
    # bf16 cast + zero padding fuse into the same XLA op (one HBM round-trip).
    xb = x_nchw.reshape(N, Cin, Ho, 2, Wo, 2)
    xb = jnp.transpose(xb, (3, 5, 0, 2, 4, 1))              # (2, 2, N, Ho, Wo, Cin)
    xb = xb.reshape(4, M2, Cin).astype(jnp.bfloat16)
    xb = jnp.pad(xb, ((0, 0), (0, m2_p - M2), (0, cin_p - Cin)))

    w = jnp.transpose(conv_w, (1, 0)).astype(jnp.bfloat16)  # (Cin, Cout)
    w = jnp.pad(w, ((0, cin_p - Cin), (0, cout_p - Cout)))

    pooled, stats = pl.pallas_call(
        conv_relu_pool_stats_kernel,
        out_shape=(
            jax.ShapeDtypeStruct((m2_p, cout_p), jnp.float32),
            jax.ShapeDtypeStruct((num_tiles, 2, cout_p), jnp.float32),
        ),
        grid=(num_tiles,),
        in_specs=[
            pl.BlockSpec((4, tm, cin_p), lambda i: (0, i, 0)),
            pl.BlockSpec((cin_p, cout_p), lambda i: (0, 0)),
        ],
        out_specs=(
            pl.BlockSpec((tm, cout_p), lambda i: (i, 0)),
            pl.BlockSpec((1, 2, cout_p), lambda i: (i, 0, 0)),
        ),
        compiler_params=pltpu.CompilerParams(
            dimension_semantics=("parallel",),       # independent tiles -> 2 TCs on v7x
            vmem_limit_bytes=32 * 1024 * 1024,       # safe on v5e/v6e/v7x at these tiles
        ),
    )(xb, w)

    # Combine per-tile partials (tiny) and fold BN into a per-channel affine.
    # Zero-padded rows/channels contribute 0 to the sums; dividing by the true
    # element count keeps the statistics exact.
    n_total = jnp.float32(4 * M2)                    # == N * H * W
    s1 = jnp.sum(stats[:, 0, :], axis=0)
    s2 = jnp.sum(stats[:, 1, :], axis=0)
    mean = s1 / n_total
    var = jnp.maximum(s2 / n_total - mean * mean, 0.0)   # biased var (PyTorch train-mode BN)
    # TODO(synk): switch to a Welford-style per-tile combine if f32 single-pass
    # E[y^2]-E[y]^2 cancellation ever matters at very large batch*spatial counts.
    inv_std = jax.lax.rsqrt(var + BN_EPS)
    gamma_p = jnp.pad(gamma.astype(jnp.float32), (0, cout_p - Cout))
    beta_p = jnp.pad(beta.astype(jnp.float32), (0, cout_p - Cout))
    scale = (gamma_p * inv_std).reshape(1, cout_p)
    shift = (beta_p - mean * gamma_p * inv_std).reshape(1, cout_p)

    out_flat = pl.pallas_call(
        normalize_kernel,
        out_shape=jax.ShapeDtypeStruct((m2_p, cout_p), jnp.float32),
        grid=(num_tiles,),
        in_specs=[
            pl.BlockSpec((tm, cout_p), lambda i: (i, 0)),
            pl.BlockSpec((1, cout_p), lambda i: (0, 0)),
            pl.BlockSpec((1, cout_p), lambda i: (0, 0)),
        ],
        out_specs=pl.BlockSpec((tm, cout_p), lambda i: (i, 0)),
        compiler_params=pltpu.CompilerParams(dimension_semantics=("parallel",)),
    )(pooled, scale, shift)

    # Back to the PyTorch NCHW output contract.
    out = out_flat[:M2, :Cout].reshape(N, Ho, Wo, Cout)
    return jnp.transpose(out, (0, 3, 1, 2))


def reference(x_nchw, conv_w, gamma, beta):
    """Pure-JAX f32 reference of the PyTorch forward (training-mode BN)."""
    y = jnp.einsum("nchw,oc->nohw", x_nchw, conv_w)
    y = jnp.maximum(y, 0.0)
    mean = jnp.mean(y, axis=(0, 2, 3), keepdims=True)
    var = jnp.mean((y - mean) ** 2, axis=(0, 2, 3), keepdims=True)
    y = (y - mean) / jnp.sqrt(var + BN_EPS) * gamma.reshape(1, -1, 1, 1) + beta.reshape(1, -1, 1, 1)
    N, C, H, W = y.shape
    return y.reshape(N, C, H // 2, 2, W // 2, 2).mean(axis=(3, 5))


if __name__ == "__main__":
    key = jax.random.PRNGKey(0)
    N, Cin, H, W = 2, 4, 16, 16
    Cout = 8

    kx, kw = jax.random.split(key)
    x = jax.random.normal(kx, (N, Cin, H, W), dtype=jnp.float32)
    # Conv2d(in, out, 1x1, bias=False) weight: (Cout, Cin, 1, 1) -> (Cout, Cin).
    conv_w = jax.random.normal(kw, (Cout, Cin), dtype=jnp.float32) / jnp.sqrt(float(Cin))
    gamma = jnp.ones((Cout,), jnp.float32)   # BatchNorm2d default affine init
    beta = jnp.zeros((Cout,), jnp.float32)

    out = transition_layer(x, conv_w, gamma, beta)
    out = jax.block_until_ready(out)

    ref = reference(x, conv_w, gamma, beta)
    assert out.shape == (N, Cout, H // 2, W // 2), out.shape
    # bf16 inputs with f32 accumulation vs an all-f32 reference.
    if not bool(jnp.allclose(out, ref, atol=3e-2, rtol=3e-2)):
        raise AssertionError("Pallas kernel output mismatch vs reference")

    print("KERNEL_OK")
</pallas_src>

<mosaic_0001>
module attributes {stable_mosaic.version = 11 : i64} {
  func.func @conv_relu_pool_stats_kernel(%arg0: i32, %arg1: memref<4x128x128xbf16, #tpu.memory_space<vmem>>, %arg2: memref<128x128xbf16, #tpu.memory_space<vmem>>, %arg3: memref<128x128xf32, #tpu.memory_space<vmem>>, %arg4: memref<1x2x128xf32, #tpu.memory_space<vmem>>) attributes {dimension_semantics = [#tpu.dimension_semantics<parallel>], iteration_bounds = array<i64: 1>, scalar_prefetch = 0 : i64, scratch_operands = 0 : i64, tpu.core_type = #tpu.core_type<tc>, window_params = [{transform_indices = @transform_0, window_bounds = array<i64: 4, 128, 128>}, {pipeline_mode = #tpu.pipeline_mode<synchronous>, transform_indices = @transform_1, window_bounds = array<i64: 128, 128>}, {transform_indices = @transform_2, window_bounds = array<i64: 128, 128>}, {transform_indices = @transform_3, window_bounds = array<i64: 1, 2, 128>}]} {
    %c0 = arith.constant 0 : index
    %c0_0 = arith.constant 0 : index
    %c0_1 = arith.constant 0 : index
    %0 = vector.load %arg1[%c0, %c0_0, %c0_1] : memref<4x128x128xbf16, #tpu.memory_space<vmem>>, vector<4x128x128xbf16>
    %1 = vector.shape_cast %0 : vector<4x128x128xbf16> to vector<512x128xbf16>
    %c0_2 = arith.constant 0 : index
    %c0_3 = arith.constant 0 : index
    %2 = vector.load %arg2[%c0_2, %c0_3] : memref<128x128xbf16, #tpu.memory_space<vmem>>, vector<128x128xbf16>
    %cst = arith.constant dense<0.000000e+00> : vector<512x128xf32>
    %3 = tpu.matmul %1, %2, %cst {dimension_numbers = #tpu.dot_dimension_numbers<[1], [0], [0], [1], [0, 0, 1, 1], [], []>} : vector<512x128xbf16>, vector<128x128xbf16>, vector<512x128xf32> -> vector<512x128xf32>
    %cst_4 = arith.constant 0.000000e+00 : f32
    %4 = vector.broadcast %cst_4 : f32 to vector<512x128xf32>
    %5 = arith.maximumf %3, %4 : vector<512x128xf32>
    %cst_5 = arith.constant dense<0.000000e+00> : vector<128xf32>
    %6 = vector.multi_reduction <add>, %5, %cst_5 [0] : vector<512x128xf32> to vector<128xf32>
    %7 = vector.shape_cast %6 : vector<128xf32> to vector<1x128xf32>
    %8 = arith.mulf %5, %5 : vector<512x128xf32>
    %cst_6 = arith.constant dense<0.000000e+00> : vector<128xf32>
    %9 = vector.multi_reduction <add>, %8, %cst_6 [0] : vector<512x128xf32> to vector<128xf32>
    %10 = vector.shape_cast %9 : vector<128xf32> to vector<1x128xf32>
    %11 = vector.shape_cast %7 : vector<1x128xf32> to vector<1x1x128xf32>
    %c0_7 = arith.constant 0 : index
    %c0_8 = arith.constant 0 : index
    %c0_9 = arith.constant 0 : index
    %12 = vector.load %arg4[%c0_7, %c0_8, %c0_9] : memref<1x2x128xf32, #tpu.memory_space<vmem>>, vector<1x1x128xf32>
    tpu.vector_store %arg4[%c0_7, %c0_8, %c0_9], %11 {strides = array<i32>} : memref<1x2x128xf32, #tpu.memory_space<vmem>>, vector<1x1x128xf32>,
    %13 = vector.shape_cast %10 : vector<1x128xf32> to vector<1x1x128xf32>
    %c0_10 = arith.constant 0 : index
    %c1 = arith.constant 1 : index
    %c0_11 = arith.constant 0 : index
    %14 = vector.load %arg4[%c0_10, %c1, %c0_11] : memref<1x2x128xf32, #tpu.memory_space<vmem>>, vector<1x1x128xf32>
    tpu.vector_store %arg4[%c0_10, %c1, %c0_11], %13 {strides = array<i32>} : memref<1x2x128xf32, #tpu.memory_space<vmem>>, vector<1x1x128xf32>,
    %15 = vector.extract_strided_slice %5 {offsets = [0, 0], sizes = [128, 128], strides = [1, 1]} : vector<512x128xf32> to vector<128x128xf32>
    %16 = vector.extract_strided_slice %5 {offsets = [128, 0], sizes = [128, 128], strides = [1, 1]} : vector<512x128xf32> to vector<128x128xf32>
    %17 = arith.addf %15, %16 : vector<128x128xf32>
    %18 = vector.extract_strided_slice %5 {offsets = [256, 0], sizes = [128, 128], strides = [1, 1]} : vector<512x128xf32> to vector<128x128xf32>
    %19 = arith.addf %17, %18 : vector<128x128xf32>
    %20 = vector.extract_strided_slice %5 {offsets = [384, 0], sizes = [128, 128], strides = [1, 1]} : vector<512x128xf32> to vector<128x128xf32>
    %21 = arith.addf %19, %20 : vector<128x128xf32>
    %cst_12 = arith.constant 2.500000e-01 : f32
    %22 = vector.broadcast %cst_12 : f32 to vector<128x128xf32>
    %23 = arith.mulf %22, %21 : vector<128x128xf32>
    %c0_13 = arith.constant 0 : index
    %c0_14 = arith.constant 0 : index
    %24 = vector.load %arg3[%c0_13, %c0_14] : memref<128x128xf32, #tpu.memory_space<vmem>>, vector<128x128xf32>
    tpu.vector_store %arg3[%c0_13, %c0_14], %23 {strides = array<i32>} : memref<128x128xf32, #tpu.memory_space<vmem>>, vector<128x128xf32>,
    return
  }
  func.func @transform_0(%arg0: i32) -> (i32, i32, i32) {
    %c0_i32 = arith.constant 0 : i32
    %c0_i32_0 = arith.constant 0 : i32
    %c0_i32_1 = arith.constant 0 : i32
    return %c0_i32, %arg0, %c0_i32_0 : i32, i32, i32
  }
  func.func @transform_1(%arg0: i32) -> (i32, i32) {
    %c0_i32 = arith.constant 0 : i32
    %c0_i32_0 = arith.constant 0 : i32
    %c0_i32_1 = arith.constant 0 : i32
    return %c0_i32, %c0_i32_0 : i32, i32
  }
  func.func @transform_2(%arg0: i32) -> (i32, i32) {
    %c0_i32 = arith.constant 0 : i32
    %c0_i32_0 = arith.constant 0 : i32
    return %arg0, %c0_i32 : i32, i32
  }
  func.func @transform_3(%arg0: i32) -> (i32, i32, i32) {
    %c0_i32 = arith.constant 0 : i32
    %c0_i32_0 = arith.constant 0 : i32
    %c0_i32_1 = arith.constant 0 : i32
    return %arg0, %c0_i32, %c0_i32_0 : i32, i32, i32
  }
}

module attributes {stable_mosaic.version = 11 : i64} {
  func.func @normalize_kernel(%arg0: i32, %arg1: memref<128x128xf32, #tpu.memory_space<vmem>>, %arg2: memref<1x128xf32, #tpu.memory_space<vmem>>, %arg3: memref<1x128xf32, #tpu.memory_space<vmem>>, %arg4: memref<128x128xf32, #tpu.memory_space<vmem>>) attributes {dimension_semantics = [#tpu.dimension_semantics<parallel>], iteration_bounds = array<i64: 1>, scalar_prefetch = 0 : i64, scratch_operands = 0 : i64, tpu.core_type = #tpu.core_type<tc>, window_params = [{transform_indices = @transform_0, window_bounds = array<i64: 128, 128>}, {pipeline_mode = #tpu.pipeline_mode<synchronous>, transform_indices = @transform_1, window_bounds = array<i64: 1, 128>}, {pipeline_mode = #tpu.pipeline_mode<synchronous>, transform_indices = @transform_2, window_bounds = array<i64: 1, 128>}, {transform_indices = @transform_3, window_bounds = array<i64: 128, 128>}]} {
    %c0 = arith.constant 0 : index
    %c0_0 = arith.constant 0 : index
    %0 = vector.load %arg1[%c0, %c0_0] : memref<128x128xf32, #tpu.memory_space<vmem>>, vector<128x128xf32>
    %c0_1 = arith.constant 0 : index
    %c0_2 = arith.constant 0 : index
    %1 = vector.load %arg2[%c0_1, %c0_2] : memref<1x128xf32, #tpu.memory_space<vmem>>, vector<1x128xf32>
    %2 = vector.broadcast %1 : vector<1x128xf32> to vector<128x128xf32>
    %3 = arith.mulf %0, %2 : vector<128x128xf32>
    %c0_3 = arith.constant 0 : index
    %c0_4 = arith.constant 0 : index
    %4 = vector.load %arg3[%c0_3, %c0_4] : memref<1x128xf32, #tpu.memory_space<vmem>>, vector<1x128xf32>
    %5 = vector.broadcast %4 : vector<1x128xf32> to vector<128x128xf32>
    %6 = arith.addf %3, %5 : vector<128x128xf32>
    %c0_5 = arith.constant 0 : index
    %c0_6 = arith.constant 0 : index
    %7 = vector.load %arg4[%c0_5, %c0_6] : memref<128x128xf32, #tpu.memory_space<vmem>>, vector<128x128xf32>
    tpu.vector_store %arg4[%c0_5, %c0_6], %6 {strides = array<i32>} : memref<128x128xf32, #tpu.memory_space<vmem>>, vector<128x128xf32>,
    return
  }
  func.func @transform_0(%arg0: i32) -> (i32, i32) {
    %c0_i32 = arith.constant 0 : i32
    %c0_i32_0 = arith.constant 0 : i32
    return %arg0, %c0_i32 : i32, i32
  }
  func.func @transform_1(%arg0: i32) -> (i32, i32) {
    %c0_i32 = arith.constant 0 : i32
    %c0_i32_0 = arith.constant 0 : i32
    %c0_i32_1 = arith.constant 0 : i32
    return %c0_i32, %c0_i32_0 : i32, i32
  }
  func.func @transform_2(%arg0: i32) -> (i32, i32) {
    %c0_i32 = arith.constant 0 : i32
    %c0_i32_0 = arith.constant 0 : i32
    %c0_i32_1 = arith.constant 0 : i32
    return %c0_i32, %c0_i32_0 : i32, i32
  }
  func.func @transform_3(%arg0: i32) -> (i32, i32) {
    %c0_i32 = arith.constant 0 : i32
    %c0_i32_0 = arith.constant 0 : i32
    return %arg0, %c0_i32 : i32, i32
  }
}

</mosaic_0001>

<llo_original>
// kernel: transition_layer.3
$region0: #{transition_layer.3}
  #allocation0 [shape = 'u32[]', space=smem, size = 0x4, offset = 0x4, fixed_abs, tag = 'smem constant byte address 0x4 - core index']
  #allocation1 [shape = 'u32[144,128]{1,0:T(1,128)}', space=vmem, size = 0x12000, scoped, tag = 'internal scratch']
  %s0 = inlined_call_operand.vmem [shape: f32[128,128], index: 0, kind: input, shape index: {}]
  %s1 = inlined_call_operand.vmem [shape: f32[1,128], index: 1, kind: input, shape index: {}]
  %s2 = inlined_call_operand.vmem [shape: f32[1,128], index: 2, kind: input, shape index: {}]
  %s3 = inlined_call_operand.vmem [shape: f32[128,128], index: 3, kind: output, shape index: {}]
  %s4 = sld [smem:[#allocation0]]
  $region22: #{transition_layer.3} parent=0
    _
  %s6 = ssub.s32 1, %s4
  %s7 = scalar_select 0, %s6, %s4
  // Predicated region
  $region2: #{transition_layer.3} parent=0 // pred_check
    _
  $region3: #{transition_layer.3} parent=0 // pred_check_branch
    %9 = sbr.rel (0) target = $region5
  $region4: #{transition_layer.3} parent=0 // pred_region
    _
  $region5: #{transition_layer.3} parent=0 // pred_fallthru
    _
  // Predicated region
  $region6: #{transition_layer.3} parent=0 // pred_check
    _
  $region7: #{transition_layer.3} parent=0 // pred_check_branch
    %11 = sbr.rel (0) target = $region9
  $region8: #{transition_layer.3} parent=0 // pred_region
    _
  $region9: #{transition_layer.3} parent=0 // pred_fallthru
    _
  // Predicated region
  $region10: #{transition_layer.3} parent=0 // pred_check
    _
  $region11: #{transition_layer.3} parent=0 // pred_check_branch
    %13 = sbr.rel (0) target = $region13
  $region12: #{transition_layer.3} parent=0 // pred_region
    _
  $region13: #{transition_layer.3} parent=0 // pred_fallthru
    _
  %v14 = vld [vmem:[%s0] sm:$0xff]
  %v15 = vld [vmem:[%s0 + $0x8] sm:$0xff]
  %v16 = vld [vmem:[%s0 + $0x10] sm:$0xff]
  %v17 = vld [vmem:[%s0 + $0x18] sm:$0xff]
  %v18 = vld [vmem:[%s0 + $0x20] sm:$0xff]
  %v19 = vld [vmem:[%s0 + $0x28] sm:$0xff]
  %v20 = vld [vmem:[%s0 + $0x30] sm:$0xff]
  %v21 = vld [vmem:[%s0 + $0x38] sm:$0xff]
  %v22 = vld [vmem:[%s0 + $0x40] sm:$0xff]
  %v23 = vld [vmem:[%s0 + $0x48] sm:$0xff]
  %v24 = vld [vmem:[%s0 + $0x50] sm:$0xff]
  %v25 = vld [vmem:[%s0 + $0x58] sm:$0xff]
  %v26 = vld [vmem:[%s0 + $0x60] sm:$0xff]
  %v27 = vld [vmem:[%s0 + $0x68] sm:$0xff]
  %v28 = vld [vmem:[%s0 + $0x70] sm:$0xff]
  %v29 = vld [vmem:[%s0 + $0x78] sm:$0xff]
  %v30 = vld [vmem:[%s1] sm:$0x1]
  %v32 = vlaneseq
  %v33 = vshrl.u32 %v32, 7
  %v34 = vsub.s32 0, %v33
  %v35 = vrot.slane %v30, %v34
  %v37 = vmul.f32 %v14, %v35
  %v38 = vmul.f32 %v15, %v35
  %v39 = vmul.f32 %v16, %v35
  %v40 = vmul.f32 %v17, %v35
  %v41 = vmul.f32 %v18, %v35
  %v42 = vmul.f32 %v19, %v35
  %v43 = vmul.f32 %v20, %v35
  %v44 = vmul.f32 %v21, %v35
  %v45 = vmul.f32 %v22, %v35
  %v46 = vmul.f32 %v23, %v35
  %v47 = vmul.f32 %v24, %v35
  %v48 = vmul.f32 %v25, %v35
  %v49 = vmul.f32 %v26, %v35
  %v50 = vmul.f32 %v27, %v35
  %v51 = vmul.f32 %v28, %v35
  %v52 = vmul.f32 %v29, %v35
  %v53 = vld [vmem:[%s2] sm:$0x1]
  %v55 = vlaneseq
  %v56 = vshrl.u32 %v55, 7
  %v57 = vsub.s32 0, %v56
  %v58 = vrot.slane %v53, %v57
  %v60 = vadd.f32 %v37, %v58
  %v61 = vadd.f32 %v38, %v58
  %v62 = vadd.f32 %v39, %v58
  %v63 = vadd.f32 %v40, %v58
  %v64 = vadd.f32 %v41, %v58
  %v65 = vadd.f32 %v42, %v58
  %v66 = vadd.f32 %v43, %v58
  %v67 = vadd.f32 %v44, %v58
  %v68 = vadd.f32 %v45, %v58
  %v69 = vadd.f32 %v46, %v58
  %v70 = vadd.f32 %v47, %v58
  %v71 = vadd.f32 %v48, %v58
  %v72 = vadd.f32 %v49, %v58
  %v73 = vadd.f32 %v50, %v58
  %v74 = vadd.f32 %v51, %v58
  %v75 = vadd.f32 %v52, %v58
  %76 = vst [vmem:[%s3] sm:$0xff] %v60
  %77 = vst [vmem:[%s3 + $0x8] sm:$0xff] %v61
  %78 = vst [vmem:[%s3 + $0x10] sm:$0xff] %v62
  %79 = vst [vmem:[%s3 + $0x18] sm:$0xff] %v63
  %80 = vst [vmem:[%s3 + $0x20] sm:$0xff] %v64
  %81 = vst [vmem:[%s3 + $0x28] sm:$0xff] %v65
  %82 = vst [vmem:[%s3 + $0x30] sm:$0xff] %v66
  %83 = vst [vmem:[%s3 + $0x38] sm:$0xff] %v67
  %84 = vst [vmem:[%s3 + $0x40] sm:$0xff] %v68
  %85 = vst [vmem:[%s3 + $0x48] sm:$0xff] %v69
  %86 = vst [vmem:[%s3 + $0x50] sm:$0xff] %v70
  %87 = vst [vmem:[%s3 + $0x58] sm:$0xff] %v71
  %88 = vst [vmem:[%s3 + $0x60] sm:$0xff] %v72
  %89 = vst [vmem:[%s3 + $0x68] sm:$0xff] %v73
  %90 = vst [vmem:[%s3 + $0x70] sm:$0xff] %v74
  %91 = vst [vmem:[%s3 + $0x78] sm:$0xff] %v75
  // Predicated region
  $region14: #{transition_layer.3} parent=0 // pred_check
    _
  $region15: #{transition_layer.3} parent=0 // pred_check_branch
    %93 = sbr.rel (0) target = $region17
  $region16: #{transition_layer.3} parent=0 // pred_region
    _
  $region17: #{transition_layer.3} parent=0 // pred_fallthru
    _
  // Predicated region
  $region18: #{transition_layer.3} parent=0 // pred_check
    _
  $region19: #{transition_layer.3} parent=0 // pred_check_branch
    %95 = sbr.rel (0) target = $region21
  $region20: #{transition_layer.3} parent=0 // pred_region
    _
  $region21: #{transition_layer.3} parent=0 // pred_fallthru
    _

// kernel: transition_layer.2
$region0: #{transition_layer.2}
  #allocation0 [shape = 'u32[]', space=smem, size = 0x4, offset = 0x4, fixed_abs, tag = 'smem constant byte address 0x4 - core index']
  #allocation1 [shape = 'u32[144,128]{1,0:T(1,128)}', space=vmem, size = 0x12000, scoped, tag = 'internal scratch']
  %s0 = inlined_call_operand.vmem [shape: bf16[4,128,128], index: 0, kind: input, shape index: {}]
  %s1 = inlined_call_operand.vmem [shape: bf16[128,128], index: 1, kind: input, shape index: {}]
  %s2 = inlined_call_operand.vmem [shape: f32[128,128], index: 2, kind: output, shape index: {0}]
  %s3 = inlined_call_operand.vmem [shape: f32[1,2,128], index: 3, kind: output, shape index: {1}]
  %4 = xla_tuple %s2, %s3
  %s5 = sld [smem:[#allocation0]]
  $region26: #{transition_layer.2} parent=0
    _
  %s7 = ssub.s32 1, %s5
  %s8 = scalar_select 0, %s7, %s5
  // Predicated region
  $region2: #{transition_layer.2} parent=0 // pred_check
    _
  $region3: #{transition_layer.2} parent=0 // pred_check_branch
    %10 = sbr.rel (0) target = $region5
  $region4: #{transition_layer.2} parent=0 // pred_region
    _
  $region5: #{transition_layer.2} parent=0 // pred_fallthru
    _
  // Predicated region
  $region6: #{transition_layer.2} parent=0 // pred_check
    _
  $region7: #{transition_layer.2} parent=0 // pred_check_branch
    %12 = sbr.rel (0) target = $region9
  $region8: #{transition_layer.2} parent=0 // pred_region
    _
  $region9: #{transition_layer.2} parent=0 // pred_fallthru
    _
  %v14 = vld [vmem:[%s0] sm:$0xf]
  %v15 = vld [vmem:[%s0 + $0x4] sm:$0xf]
  %v16 = vld [vmem:[%s0 + $0x8] sm:$0xf]
  %v17 = vld [vmem:[%s0 + $0xc] sm:$0xf]
  %v18 = vld [vmem:[%s0 + $0x10] sm:$0xf]
  %v19 = vld [vmem:[%s0 + $0x14] sm:$0xf]
  %v20 = vld [vmem:[%s0 + $0x18] sm:$0xf]
  %v21 = vld [vmem:[%s0 + $0x1c] sm:$0xf]
  %v22 = vld [vmem:[%s0 + $0x20] sm:$0xf]
  %v23 = vld [vmem:[%s0 + $0x24] sm:$0xf]
  %v24 = vld [vmem:[%s0 + $0x28] sm:$0xf]
  %v25 = vld [vmem:[%s0 + $0x2c] sm:$0xf]
  %v26 = vld [vmem:[%s0 + $0x30] sm:$0xf]
  %v27 = vld [vmem:[%s0 + $0x34] sm:$0xf]
  %v28 = vld [vmem:[%s0 + $0x38] sm:$0xf]
  %v29 = vld [vmem:[%s0 + $0x3c] sm:$0xf]
  %v30 = vld [vmem:[%s0 + $0x40] sm:$0xf]
  %v31 = vld [vmem:[%s0 + $0x44] sm:$0xf]
  %v32 = vld [vmem:[%s0 + $0x48] sm:$0xf]
  %v33 = vld [vmem:[%s0 + $0x4c] sm:$0xf]
  %v34 = vld [vmem:[%s0 + $0x50] sm:$0xf]
  %v35 = vld [vmem:[%s0 + $0x54] sm:$0xf]
  %v36 = vld [vmem:[%s0 + $0x58] sm:$0xf]
  %v37 = vld [vmem:[%s0 + $0x5c] sm:$0xf]
  %v38 = vld [vmem:[%s0 + $0x60] sm:$0xf]
  %v39 = vld [vmem:[%s0 + $0x64] sm:$0xf]
  %v40 = vld [vmem:[%s0 + $0x68] sm:$0xf]
  %v41 = vld [vmem:[%s0 + $0x6c] sm:$0xf]
  %v42 = vld [vmem:[%s0 + $0x70] sm:$0xf]
  %v43 = vld [vmem:[%s0 + $0x74] sm:$0xf]
  %v44 = vld [vmem:[%s0 + $0x78] sm:$0xf]
  %v45 = vld [vmem:[%s0 + $0x7c] sm:$0xf]
  %v46 = vld [vmem:[%s0 + $0x80] sm:$0xf]
  %v47 = vld [vmem:[%s0 + $0x84] sm:$0xf]
  %v48 = vld [vmem:[%s0 + $0x88] sm:$0xf]
  %v49 = vld [vmem:[%s0 + $0x8c] sm:$0xf]
  %v50 = vld [vmem:[%s0 + $0x90] sm:$0xf]
  %v51 = vld [vmem:[%s0 + $0x94] sm:$0xf]
  %v52 = vld [vmem:[%s0 + $0x98] sm:$0xf]
  %v53 = vld [vmem:[%s0 + $0x9c] sm:$0xf]
  %v54 = vld [vmem:[%s0 + $0xa0] sm:$0xf]
  %v55 = vld [vmem:[%s0 + $0xa4] sm:$0xf]
  %v56 = vld [vmem:[%s0 + $0xa8] sm:$0xf]
  %v57 = vld [vmem:[%s0 + $0xac] sm:$0xf]
  %v58 = vld [vmem:[%s0 + $0xb0] sm:$0xf]
  %v59 = vld [vmem:[%s0 + $0xb4] sm:$0xf]
  %v60 = vld [vmem:[%s0 + $0xb8] sm:$0xf]
  %v61 = vld [vmem:[%s0 + $0xbc] sm:$0xf]
  %v62 = vld [vmem:[%s0 + $0xc0] sm:$0xf]
  %v63 = vld [vmem:[%s0 + $0xc4] sm:$0xf]
  %v64 = vld [vmem:[%s0 + $0xc8] sm:$0xf]
  %v65 = vld [vmem:[%s0 + $0xcc] sm:$0xf]
  %v66 = vld [vmem:[%s0 + $0xd0] sm:$0xf]
  %v67 = vld [vmem:[%s0 + $0xd4] sm:$0xf]
  %v68 = vld [vmem:[%s0 + $0xd8] sm:$0xf]
  %v69 = vld [vmem:[%s0 + $0xdc] sm:$0xf]
  %v70 = vld [vmem:[%s0 + $0xe0] sm:$0xf]
  %v71 = vld [vmem:[%s0 + $0xe4] sm:$0xf]
  %v72 = vld [vmem:[%s0 + $0xe8] sm:$0xf]
  %v73 = vld [vmem:[%s0 + $0xec] sm:$0xf]
  %v74 = vld [vmem:[%s0 + $0xf0] sm:$0xf]
  %v75 = vld [vmem:[%s0 + $0xf4] sm:$0xf]
  %v76 = vld [vmem:[%s0 + $0xf8] sm:$0xf]
  %v77 = vld [vmem:[%s0 + $0xfc] sm:$0xf]
  %v78 = vld [vmem:[%s1] sm:$0xf]
  %v79 = vld [vmem:[%s1 + $0x4] sm:$0xf]
  %v80 = vld [vmem:[%s1 + $0x8] sm:$0xf]
  %v81 = vld [vmem:[%s1 + $0xc] sm:$0xf]
  %v82 = vld [vmem:[%s1 + $0x10] sm:$0xf]
  %v83 = vld [vmem:[%s1 + $0x14] sm:$0xf]
  %v84 = vld [vmem:[%s1 + $0x18] sm:$0xf]
  %v85 = vld [vmem:[%s1 + $0x1c] sm:$0xf]
  %v86 = vld [vmem:[%s1 + $0x20] sm:$0xf]
  %v87 = vld [vmem:[%s1 + $0x24] sm:$0xf]
  %v88 = vld [vmem:[%s1 + $0x28] sm:$0xf]
  %v89 = vld [vmem:[%s1 + $0x2c] sm:$0xf]
  %v90 = vld [vmem:[%s1 + $0x30] sm:$0xf]
  %v91 = vld [vmem:[%s1 + $0x34] sm:$0xf]
  %v92 = vld [vmem:[%s1 + $0x38] sm:$0xf]
  %v93 = vld [vmem:[%s1 + $0x3c] sm:$0xf]
  %v158 = vunpack.c.l.b16 %v14
  %v159 = vunpack.c.l.b16 %v15
  %v160 = vunpack.c.l.b16 %v16
  %v161 = vunpack.c.l.b16 %v17
  %v162 = vunpack.c.l.b16 %v18
  %v163 = vunpack.c.l.b16 %v19
  %v164 = vunpack.c.l.b16 %v20
  %v165 = vunpack.c.l.b16 %v21
  %v166 = vunpack.c.l.b16 %v22
  %v167 = vunpack.c.l.b16 %v23
  %v168 = vunpack.c.l.b16 %v24
  %v169 = vunpack.c.l.b16 %v25
  %v170 = vunpack.c.l.b16 %v26
  %v171 = vunpack.c.l.b16 %v27
  %v172 = vunpack.c.l.b16 %v28
  %v173 = vunpack.c.l.b16 %v29
  %v174 = vunpack.c.l.b16 %v30
  %v175 = vunpack.c.l.b16 %v31
  %v176 = vunpack.c.l.b16 %v32
  %v177 = vunpack.c.l.b16 %v33
  %v178 = vunpack.c.l.b16 %v34
  %v179 = vunpack.c.l.b16 %v35
  %v180 = vunpack.c.l.b16 %v36
  %v181 = vunpack.c.l.b16 %v37
  %v182 = vunpack.c.l.b16 %v38
  %v183 = vunpack.c.l.b16 %v39
  %v184 = vunpack.c.l.b16 %v40
  %v185 = vunpack.c.l.b16 %v41
  %v186 = vunpack.c.l.b16 %v42
  %v187 = vunpack.c.l.b16 %v43
  %v188 = vunpack.c.l.b16 %v44
  %v189 = vunpack.c.l.b16 %v45
  %v190 = vunpack.c.l.b16 %v46
  %v191 = vunpack.c.l.b16 %v47
  %v192 = vunpack.c.l.b16 %v48
  %v193 = vunpack.c.l.b16 %v49
  %v194 = vunpack.c.l.b16 %v50
  %v195 = vunpack.c.l.b16 %v51
  %v196 = vunpack.c.l.b16 %v52
  %v197 = vunpack.c.l.b16 %v53
  %v198 = vunpack.c.l.b16 %v54
  %v199 = vunpack.c.l.b16 %v55
  %v200 = vunpack.c.l.b16 %v56
  %v201 = vunpack.c.l.b16 %v57
  %v202 = vunpack.c.l.b16 %v58
  %v203 = vunpack.c.l.b16 %v59
  %v204 = vunpack.c.l.b16 %v60
  %v205 = vunpack.c.l.b16 %v61
  %v206 = vunpack.c.l.b16 %v62
  %v207 = vunpack.c.l.b16 %v63
  %v208 = vunpack.c.l.b16 %v64
  %v209 = vunpack.c.l.b16 %v65
  %v210 = vunpack.c.l.b16 %v66
  %v211 = vunpack.c.l.b16 %v67
  %v212 = vunpack.c.l.b16 %v68
  %v213 = vunpack.c.l.b16 %v69
  %v214 = vunpack.c.l.b16 %v70
  %v215 = vunpack.c.l.b16 %v71
  %v216 = vunpack.c.l.b16 %v72
  %v217 = vunpack.c.l.b16 %v73
  %v218 = vunpack.c.l.b16 %v74
  %v219 = vunpack.c.l.b16 %v75
  %v220 = vunpack.c.l.b16 %v76
  %v221 = vunpack.c.l.b16 %v77
  %v222 = vpack.c.b16 %v159, %v158
  %v223 = vpack.c.b16 %v161, %v160
  %v224 = vpack.c.b16 %v163, %v162
  %v225 = vpack.c.b16 %v165, %v164
  %v226 = vpack.c.b16 %v167, %v166
  %v227 = vpack.c.b16 %v169, %v168
  %v228 = vpack.c.b16 %v171, %v170
  %v229 = vpack.c.b16 %v173, %v172
  %v230 = vpack.c.b16 %v175, %v174
  %v231 = vpack.c.b16 %v177, %v176
  %v232 = vpack.c.b16 %v179, %v178
  %v233 = vpack.c.b16 %v181, %v180
  %v234 = vpack.c.b16 %v183, %v182
  %v235 = vpack.c.b16 %v185, %v184
  %v236 = vpack.c.b16 %v187, %v186
  %v237 = vpack.c.b16 %v189, %v188
  %v238 = vpack.c.b16 %v191, %v190
  %v239 = vpack.c.b16 %v193, %v192
  %v240 = vpack.c.b16 %v195, %v194
  %v241 = vpack.c.b16 %v197, %v196
  %v242 = vpack.c.b16 %v199, %v198
  %v243 = vpack.c.b16 %v201, %v200
  %v244 = vpack.c.b16 %v203, %v202
  %v245 = vpack.c.b16 %v205, %v204
  %v246 = vpack.c.b16 %v207, %v206
  %v247 = vpack.c.b16 %v209, %v208
  %v248 = vpack.c.b16 %v211, %v210
  %v249 = vpack.c.b16 %v213, %v212
  %v250 = vpack.c.b16 %v215, %v214
  %v251 = vpack.c.b16 %v217, %v216
  %v252 = vpack.c.b16 %v219, %v218
  %v253 = vpack.c.b16 %v221, %v220
  %v302 = vunpack.c.l.b16 %v78
  %v303 = vunpack.c.l.b16 %v79
  %v304 = vunpack.c.l.b16 %v80
  %v305 = vunpack.c.l.b16 %v81
  %v306 = vunpack.c.l.b16 %v82
  %v307 = vunpack.c.l.b16 %v83
  %v308 = vunpack.c.l.b16 %v84
  %v309 = vunpack.c.l.b16 %v85
  %v310 = vunpack.c.l.b16 %v86
  %v311 = vunpack.c.l.b16 %v87
  %v312 = vunpack.c.l.b16 %v88
  %v313 = vunpack.c.l.b16 %v89
  %v314 = vunpack.c.l.b16 %v90
  %v315 = vunpack.c.l.b16 %v91
  %v316 = vunpack.c.l.b16 %v92
  %v317 = vunpack.c.l.b16 %v93
  %v318 = vpack.c.b16 %v303, %v302
  %v319 = vpack.c.b16 %v305, %v304
  %v320 = vpack.c.b16 %v307, %v306
  %v321 = vpack.c.b16 %v309, %v308
  %v322 = vpack.c.b16 %v311, %v310
  %v323 = vpack.c.b16 %v313, %v312
  %v324 = vpack.c.b16 %v315, %v314
  %v325 = vpack.c.b16 %v317, %v316
  %334 = vmatprep.subr.bf16.mxu0 0
  %335 = vmatpush1.bf16.msra.mxu0 %v325
  %336 = vmatprep.subr.bf16.mxu0 0
  %337 = vmatpush1.bf16.msra.mxu0 %v324
  %338 = vmatprep.subr.bf16.mxu0 0
  %339 = vmatpush1.bf16.msra.mxu0 %v323
  %340 = vmatprep.subr.bf16.mxu0 0
  %341 = vmatpush1.bf16.msra.mxu0 %v322
  %342 = vmatprep.subr.bf16.mxu0 0
  %343 = vmatpush1.bf16.msra.mxu0 %v321
  %344 = vmatprep.subr.bf16.mxu0 0
  %345 = vmatpush1.bf16.msra.mxu0 %v320
  %346 = vmatprep.subr.bf16.mxu0 0
  %347 = vmatpush1.bf16.msra.mxu0 %v319
  %348 = vmatprep.subr.bf16.mxu0 0
  %349 = vmatpush1.bf16.msra.mxu0 %v318
  %350 = vmatprep.subr.bf16.mxu0 0
  %351 = vmatpush2.bf16.msra.mxu0 0
  %352 = vmatprep.subr.bf16.mxu0 0
  %353 = vmatpush2.bf16.msra.mxu0 0
  %354 = vmatprep.subr.bf16.mxu0 0
  %355 = vmatpush2.bf16.msra.mxu0 0
  %356 = vmatprep.subr.bf16.mxu0 0
  %357 = vmatpush2.bf16.msra.mxu0 0
  %358 = vmatprep.subr.bf16.mxu0 0
  %359 = vmatpush2.bf16.msra.mxu0 0
  %360 = vmatprep.subr.bf16.mxu0 0
  %361 = vmatpush2.bf16.msra.mxu0 0
  %362 = vmatprep.subr.bf16.mxu0 0
  %363 = vmatpush2.bf16.msra.mxu0 0
  %364 = vmatprep.subr.bf16.mxu0 0
  %365 = vmatpush2.bf16.msra.mxu0 0
  %366 = vmatprep.mubr.bf16.mxu0 0
  %367 = vmatmul.mubr.bf16.gmra.mxu0 %v222
  %v368 = vpop.f32.mrf.mxu0
  %v369 = vadd.f32 0.0, %v368
  %v370 = vpop.f32.mrf.mxu0
  %v371 = vpop.f32.mrf.mxu0
  %v372 = vadd.f32 0.0, %v371
  %v373 = vpop.f32.mrf.mxu0
  %374 = vmatprep.mubr.bf16.mxu0 0
  %375 = vmatmul.mubr.bf16.gmra.mxu0 %v223
  %v376 = vpop.f32.mrf.mxu0
  %v377 = vadd.f32 0.0, %v376
  %v378 = vpop.f32.mrf.mxu0
  %v379 = vpop.f32.mrf.mxu0
  %v380 = vadd.f32 0.0, %v379
  %v381 = vpop.f32.mrf.mxu0
  %382 = vmatprep.mubr.bf16.mxu0 0
  %383 = vmatmul.mubr.bf16.gmra.mxu0 %v224
  %v384 = vpop.f32.mrf.mxu0
  %v385 = vadd.f32 0.0, %v384
  %v386 = vpop.f32.mrf.mxu0
  %v387 = vpop.f32.mrf.mxu0
  %v388 = vadd.f32 0.0, %v387
  %v389 = vpop.f32.mrf.mxu0
  %390 = vmatprep.mubr.bf16.mxu0 0
  %391 = vmatmul.mubr.bf16.gmra.mxu0 %v225
  %v392 = vpop.f32.mrf.mxu0
  %v393 = vadd.f32 0.0, %v392
  %v394 = vpop.f32.mrf.mxu0
  %v395 = vpop.f32.mrf.mxu0
  %v396 = vadd.f32 0.0, %v395
  %v397 = vpop.f32.mrf.mxu0
  %398 = vmatprep.mubr.bf16.mxu0 0
  %399 = vmatmul.mubr.bf16.gmra.mxu0 %v226
  %v400 = vpop.f32.mrf.mxu0
  %v401 = vadd.f32 0.0, %v400
  %v402 = vpop.f32.mrf.mxu0
  %v403 = vpop.f32.mrf.mxu0
  %v404 = vadd.f32 0.0, %v403
  %v405 = vpop.f32.mrf.mxu0
  %406 = vmatprep.mubr.bf16.mxu0 0
  %407 = vmatmul.mubr.bf16.gmra.mxu0 %v227
  %v408 = vpop.f32.mrf.mxu0
  %v409 = vadd.f32 0.0, %v408
  %v410 = vpop.f32.mrf.mxu0
  %v411 = vpop.f32.mrf.mxu0
  %v412 = vadd.f32 0.0, %v411
  %v413 = vpop.f32.mrf.mxu0
  %414 = vmatprep.mubr.bf16.mxu0 0
  %415 = vmatmul.mubr.bf16.gmra.mxu0 %v228
  %v416 = vpop.f32.mrf.mxu0
  %v417 = vadd.f32 0.0, %v416
  %v418 = vpop.f32.mrf.mxu0
  %v419 = vpop.f32.mrf.mxu0
  %v420 = vadd.f32 0.0, %v419
  %v421 = vpop.f32.mrf.mxu0
  %422 = vmatprep.mubr.bf16.mxu0 0
  %423 = vmatmul.mubr.bf16.gmra.mxu0 %v229
  %v424 = vpop.f32.mrf.mxu0
  %v425 = vadd.f32 0.0, %v424
  %v426 = vpop.f32.mrf.mxu0
  %v427 = vpop.f32.mrf.mxu0
  %v428 = vadd.f32 0.0, %v427
  %v429 = vpop.f32.mrf.mxu0
  %430 = vmatprep.mubr.bf16.mxu0 0
  %431 = vmatmul.mubr.bf16.gmra.mxu0 %v230
  %v432 = vpop.f32.mrf.mxu0
  %v433 = vadd.f32 0.0, %v432
  %v434 = vpop.f32.mrf.mxu0
  %v435 = vpop.f32.mrf.mxu0
  %v436 = vadd.f32 0.0, %v435
  %v437 = vpop.f32.mrf.mxu0
  %438 = vmatprep.mubr.bf16.mxu0 0
  %439 = vmatmul.mubr.bf16.gmra.mxu0 %v231
  %v440 = vpop.f32.mrf.mxu0
  %v441 = vadd.f32 0.0, %v440
  %v442 = vpop.f32.mrf.mxu0
  %v443 = vpop.f32.mrf.mxu0
  %v444 = vadd.f32 0.0, %v443
  %v445 = vpop.f32.mrf.mxu0
  %446 = vmatprep.mubr.bf16.mxu0 0
  %447 = vmatmul.mubr.bf16.gmra.mxu0 %v232
  %v448 = vpop.f32.mrf.mxu0
  %v449 = vadd.f32 0.0, %v448
  %v450 = vpop.f32.mrf.mxu0
  %v451 = vpop.f32.mrf.mxu0
  %v452 = vadd.f32 0.0, %v451
  %v453 = vpop.f32.mrf.mxu0
  %454 = vmatprep.mubr.bf16.mxu0 0
  %455 = vmatmul.mubr.bf16.gmra.mxu0 %v233
  %v456 = vpop.f32.mrf.mxu0
  %v457 = vadd.f32 0.0, %v456
  %v458 = vpop.f32.mrf.mxu0
  %v459 = vpop.f32.mrf.mxu0
  %v460 = vadd.f32 0.0, %v459
  %v461 = vpop.f32.mrf.mxu0
  %462 = vmatprep.mubr.bf16.mxu0 0
  %463 = vmatmul.mubr.bf16.gmra.mxu0 %v234
  %v464 = vpop.f32.mrf.mxu0
  %v465 = vadd.f32 0.0, %v464
  %v466 = vpop.f32.mrf.mxu0
  %v467 = vpop.f32.mrf.mxu0
  %v468 = vadd.f32 0.0, %v467
  %v469 = vpop.f32.mrf.mxu0
  %470 = vmatprep.mubr.bf16.mxu0 0
  %471 = vmatmul.mubr.bf16.gmra.mxu0 %v235
  %v472 = vpop.f32.mrf.mxu0
  %v473 = vadd.f32 0.0, %v472
  %v474 = vpop.f32.mrf.mxu0
  %v475 = vpop.f32.mrf.mxu0
  %v476 = vadd.f32 0.0, %v475
  %v477 = vpop.f32.mrf.mxu0
  %478 = vmatprep.mubr.bf16.mxu0 0
  %479 = vmatmul.mubr.bf16.gmra.mxu0 %v236
  %v480 = vpop.f32.mrf.mxu0
  %v481 = vadd.f32 0.0, %v480
  %v482 = vpop.f32.mrf.mxu0
  %v483 = vpop.f32.mrf.mxu0
  %v484 = vadd.f32 0.0, %v483
  %v485 = vpop.f32.mrf.mxu0
  %486 = vmatprep.mubr.bf16.mxu0 0
  %487 = vmatmul.mubr.bf16.gmra.mxu0 %v237
  %v488 = vpop.f32.mrf.mxu0
  %v489 = vadd.f32 0.0, %v488
  %v490 = vpop.f32.mrf.mxu0
  %v491 = vpop.f32.mrf.mxu0
  %v492 = vadd.f32 0.0, %v491
  %v493 = vpop.f32.mrf.mxu0
  %494 = vmatprep.mubr.bf16.mxu0 0
  %495 = vmatmul.mubr.bf16.gmra.mxu0 %v238
  %v496 = vpop.f32.mrf.mxu0
  %v497 = vadd.f32 0.0, %v496
  %v498 = vpop.f32.mrf.mxu0
  %v499 = vpop.f32.mrf.mxu0
  %v500 = vadd.f32 0.0, %v499
  %v501 = vpop.f32.mrf.mxu0
  %502 = vmatprep.mubr.bf16.mxu0 0
  %503 = vmatmul.mubr.bf16.gmra.mxu0 %v239
  %v504 = vpop.f32.mrf.mxu0
  %v505 = vadd.f32 0.0, %v504
  %v506 = vpop.f32.mrf.mxu0
  %v507 = vpop.f32.mrf.mxu0
  %v508 = vadd.f32 0.0, %v507
  %v509 = vpop.f32.mrf.mxu0
  %510 = vmatprep.mubr.bf16.mxu0 0
  %511 = vmatmul.mubr.bf16.gmra.mxu0 %v240
  %v512 = vpop.f32.mrf.mxu0
  %v513 = vadd.f32 0.0, %v512
  %v514 = vpop.f32.mrf.mxu0
  %v515 = vpop.f32.mrf.mxu0
  %v516 = vadd.f32 0.0, %v515
  %v517 = vpop.f32.mrf.mxu0
  %518 = vmatprep.mubr.bf16.mxu0 0
  %519 = vmatmul.mubr.bf16.gmra.mxu0 %v241
  %v520 = vpop.f32.mrf.mxu0
  %v521 = vadd.f32 0.0, %v520
  %v522 = vpop.f32.mrf.mxu0
  %v523 = vpop.f32.mrf.mxu0
  %v524 = vadd.f32 0.0, %v523
  %v525 = vpop.f32.mrf.mxu0
  %526 = vmatprep.mubr.bf16.mxu0 0
  %527 = vmatmul.mubr.bf16.gmra.mxu0 %v242
  %v528 = vpop.f32.mrf.mxu0
  %v529 = vadd.f32 0.0, %v528
  %v530 = vpop.f32.mrf.mxu0
  %v531 = vpop.f32.mrf.mxu0
  %v532 = vadd.f32 0.0, %v531
  %v533 = vpop.f32.mrf.mxu0
  %534 = vmatprep.mubr.bf16.mxu0 0
  %535 = vmatmul.mubr.bf16.gmra.mxu0 %v243
  %v536 = vpop.f32.mrf.mxu0
  %v537 = vadd.f32 0.0, %v536
  %v538 = vpop.f32.mrf.mxu0
  %v539 = vpop.f32.mrf.mxu0
  %v540 = vadd.f32 0.0, %v539
  %v541 = vpop.f32.mrf.mxu0
  %542 = vmatprep.mubr.bf16.mxu0 0
  %543 = vmatmul.mubr.bf16.gmra.mxu0 %v244
  %v544 = vpop.f32.mrf.mxu0
  %v545 = vadd.f32 0.0, %v544
  %v546 = vpop.f32.mrf.mxu0
  %v547 = vpop.f32.mrf.mxu0
  %v548 = vadd.f32 0.0, %v547
  %v549 = vpop.f32.mrf.mxu0
  %550 = vmatprep.mubr.bf16.mxu0 0
  %551 = vmatmul.mubr.bf16.gmra.mxu0 %v245
  %v552 = vpop.f32.mrf.mxu0
  %v553 = vadd.f32 0.0, %v552
  %v554 = vpop.f32.mrf.mxu0
  %v555 = vpop.f32.mrf.mxu0
  %v556 = vadd.f32 0.0, %v555
  %v557 = vpop.f32.mrf.mxu0
  %558 = vmatprep.mubr.bf16.mxu0 0
  %559 = vmatmul.mubr.bf16.gmra.mxu0 %v246
  %v560 = vpop.f32.mrf.mxu0
  %v561 = vadd.f32 0.0, %v560
  %v562 = vpop.f32.mrf.mxu0
  %v563 = vpop.f32.mrf.mxu0
  %v564 = vadd.f32 0.0, %v563
  %v565 = vpop.f32.mrf.mxu0
  %566 = vmatprep.mubr.bf16.mxu0 0
  %567 = vmatmul.mubr.bf16.gmra.mxu0 %v247
  %v568 = vpop.f32.mrf.mxu0
  %v569 = vadd.f32 0.0, %v568
  %v570 = vpop.f32.mrf.mxu0
  %v571 = vpop.f32.mrf.mxu0
  %v572 = vadd.f32 0.0, %v571
  %v573 = vpop.f32.mrf.mxu0
  %574 = vmatprep.mubr.bf16.mxu0 0
  %575 = vmatmul.mubr.bf16.gmra.mxu0 %v248
  %v576 = vpop.f32.mrf.mxu0
  %v577 = vadd.f32 0.0, %v576
  %v578 = vpop.f32.mrf.mxu0
  %v579 = vpop.f32.mrf.mxu0
  %v580 = vadd.f32 0.0, %v579
  %v581 = vpop.f32.mrf.mxu0
  %582 = vmatprep.mubr.bf16.mxu0 0
  %583 = vmatmul.mubr.bf16.gmra.mxu0 %v249
  %v584 = vpop.f32.mrf.mxu0
  %v585 = vadd.f32 0.0, %v584
  %v586 = vpop.f32.mrf.mxu0
  %v587 = vpop.f32.mrf.mxu0
  %v588 = vadd.f32 0.0, %v587
  %v589 = vpop.f32.mrf.mxu0
  %590 = vmatprep.mubr.bf16.mxu0 0
  %591 = vmatmul.mubr.bf16.gmra.mxu0 %v250
  %v592 = vpop.f32.mrf.mxu0
  %v593 = vadd.f32 0.0, %v592
  %v594 = vpop.f32.mrf.mxu0
  %v595 = vpop.f32.mrf.mxu0
  %v596 = vadd.f32 0.0, %v595
  %v597 = vpop.f32.mrf.mxu0
  %598 = vmatprep.mubr.bf16.mxu0 0
  %599 = vmatmul.mubr.bf16.gmra.mxu0 %v251
  %v600 = vpop.f32.mrf.mxu0
  %v601 = vadd.f32 0.0, %v600
  %v602 = vpop.f32.mrf.mxu0
  %v603 = vpop.f32.mrf.mxu0
  %v604 = vadd.f32 0.0, %v603
  %v605 = vpop.f32.mrf.mxu0
  %606 = vmatprep.mubr.bf16.mxu0 0
  %607 = vmatmul.mubr.bf16.gmra.mxu0 %v252
  %v608 = vpop.f32.mrf.mxu0
  %v609 = vadd.f32 0.0, %v608
  %v610 = vpop.f32.mrf.mxu0
  %v611 = vpop.f32.mrf.mxu0
  %v612 = vadd.f32 0.0, %v611
  %v613 = vpop.f32.mrf.mxu0
  %614 = vmatprep.mubr.bf16.mxu0 0
  %615 = vmatmul.mubr.bf16.gmra.mxu0 %v253
  %v616 = vpop.f32.mrf.mxu0
  %v617 = vadd.f32 0.0, %v616
  %v618 = vpop.f32.mrf.mxu0
  %v619 = vpop.f32.mrf.mxu0
  %v620 = vadd.f32 0.0, %v619
  %v621 = vpop.f32.mrf.mxu0
  %622 = vdwg.mxu0
  %v623 = vmax.f32 %v369, 0.0
  %v624 = vmax.f32 %v372, 0.0
  %v625 = vmax.f32 %v377, 0.0
  %v626 = vmax.f32 %v380, 0.0
  %v627 = vmax.f32 %v385, 0.0
  %v628 = vmax.f32 %v388, 0.0
  %v629 = vmax.f32 %v393, 0.0
  %v630 = vmax.f32 %v396, 0.0
  %v631 = vmax.f32 %v401, 0.0
  %v632 = vmax.f32 %v404, 0.0
  %v633 = vmax.f32 %v409, 0.0
  %v634 = vmax.f32 %v412, 0.0
  %v635 = vmax.f32 %v417, 0.0
  %v636 = vmax.f32 %v420, 0.0
  %v637 = vmax.f32 %v425, 0.0
  %v638 = vmax.f32 %v428, 0.0
  %v639 = vmax.f32 %v433, 0.0
  %v640 = vmax.f32 %v436, 0.0
  %v641 = vmax.f32 %v441, 0.0
  %v642 = vmax.f32 %v444, 0.0
  %v643 = vmax.f32 %v449, 0.0
  %v644 = vmax.f32 %v452, 0.0
  %v645 = vmax.f32 %v457, 0.0
  %v646 = vmax.f32 %v460, 0.0
  %v647 = vmax.f32 %v465, 0.0
  %v648 = vmax.f32 %v468, 0.0
  %v649 = vmax.f32 %v473, 0.0
  %v650 = vmax.f32 %v476, 0.0
  %v651 = vmax.f32 %v481, 0.0
  %v652 = vmax.f32 %v484, 0.0
  %v653 = vmax.f32 %v489, 0.0
  %v654 = vmax.f32 %v492, 0.0
  %v655 = vmax.f32 %v497, 0.0
  %v656 = vmax.f32 %v500, 0.0
  %v657 = vmax.f32 %v505, 0.0
  %v658 = vmax.f32 %v508, 0.0
  %v659 = vmax.f32 %v513, 0.0
  %v660 = vmax.f32 %v516, 0.0
  %v661 = vmax.f32 %v521, 0.0
  %v662 = vmax.f32 %v524, 0.0
  %v663 = vmax.f32 %v529, 0.0
  %v664 = vmax.f32 %v532, 0.0
  %v665 = vmax.f32 %v537, 0.0
  %v666 = vmax.f32 %v540, 0.0
  %v667 = vmax.f32 %v545, 0.0
  %v668 = vmax.f32 %v548, 0.0
  %v669 = vmax.f32 %v553, 0.0
  %v670 = vmax.f32 %v556, 0.0
  %v671 = vmax.f32 %v561, 0.0
  %v672 = vmax.f32 %v564, 0.0
  %v673 = vmax.f32 %v569, 0.0
  %v674 = vmax.f32 %v572, 0.0
  %v675 = vmax.f32 %v577, 0.0
  %v676 = vmax.f32 %v580, 0.0
  %v677 = vmax.f32 %v585, 0.0
  %v678 = vmax.f32 %v588, 0.0
  %v679 = vmax.f32 %v593, 0.0
  %v680 = vmax.f32 %v596, 0.0
  %v681 = vmax.f32 %v601, 0.0
  %v682 = vmax.f32 %v604, 0.0
  %v683 = vmax.f32 %v609, 0.0
  %v684 = vmax.f32 %v612, 0.0
  %v685 = vmax.f32 %v617, 0.0
  %v686 = vmax.f32 %v620, 0.0
  %v687 = vadd.f32 %v623, %v624
  %v688 = vadd.f32 %v687, %v625
  %v689 = vadd.f32 %v688, %v626
  %v690 = vadd.f32 %v689, %v627
  %v691 = vadd.f32 %v690, %v628
  %v692 = vadd.f32 %v691, %v629
  %v693 = vadd.f32 %v692, %v630
  %v694 = vadd.f32 %v693, %v631
  %v695 = vadd.f32 %v694, %v632
  %v696 = vadd.f32 %v695, %v633
  %v697 = vadd.f32 %v696, %v634
  %v698 = vadd.f32 %v697, %v635
  %v699 = vadd.f32 %v698, %v636
  %v700 = vadd.f32 %v699, %v637
  %v701 = vadd.f32 %v700, %v638
  %v702 = vadd.f32 %v701, %v639
  %v703 = vadd.f32 %v702, %v640
  %v704 = vadd.f32 %v703, %v641
  %v705 = vadd.f32 %v704, %v642
  %v706 = vadd.f32 %v705, %v643
  %v707 = vadd.f32 %v706, %v644
  %v708 = vadd.f32 %v707, %v645
  %v709 = vadd.f32 %v708, %v646
  %v710 = vadd.f32 %v709, %v647
  %v711 = vadd.f32 %v710, %v648
  %v712 = vadd.f32 %v711, %v649
  %v713 = vadd.f32 %v712, %v650
  %v714 = vadd.f32 %v713, %v651
  %v715 = vadd.f32 %v714, %v652
  %v716 = vadd.f32 %v715, %v653
  %v717 = vadd.f32 %v716, %v654
  %v718 = vadd.f32 %v717, %v655
  %v719 = vadd.f32 %v718, %v656
  %v720 = vadd.f32 %v719, %v657
  %v721 = vadd.f32 %v720, %v658
  %v722 = vadd.f32 %v721, %v659
  %v723 = vadd.f32 %v722, %v660
  %v724 = vadd.f32 %v723, %v661
  %v725 = vadd.f32 %v724, %v662
  %v726 = vadd.f32 %v725, %v663
  %v727 = vadd.f32 %v726, %v664
  %v728 = vadd.f32 %v727, %v665
  %v729 = vadd.f32 %v728, %v666
  %v730 = vadd.f32 %v729, %v667
  %v731 = vadd.f32 %v730, %v668
  %v732 = vadd.f32 %v731, %v669
  %v733 = vadd.f32 %v732, %v670
  %v734 = vadd.f32 %v733, %v671
  %v735 = vadd.f32 %v734, %v672
  %v736 = vadd.f32 %v735, %v673
  %v737 = vadd.f32 %v736, %v674
  %v738 = vadd.f32 %v737, %v675
  %v739 = vadd.f32 %v738, %v676
  %v740 = vadd.f32 %v739, %v677
  %v741 = vadd.f32 %v740, %v678
  %v742 = vadd.f32 %v741, %v679
  %v743 = vadd.f32 %v742, %v680
  %v744 = vadd.f32 %v743, %v681
  %v745 = vadd.f32 %v744, %v682
  %v746 = vadd.f32 %v745, %v683
  %v747 = vadd.f32 %v746, %v684
  %v748 = vadd.f32 %v747, %v685
  %v749 = vadd.f32 %v748, %v686
  %v750 = vrot.slane %v749, 4
  %v751 = vadd.f32 %v749, %v750
  %v752 = vrot.slane %v751, 2
  %v753 = vadd.f32 %v751, %v752
  %v754 = vrot.slane %v753, 1
  %v755 = vadd.f32 %v753, %v754
  %v756 = vmul.f32 %v623, %v623
  %v757 = vmul.f32 %v624, %v624
  %v758 = vmul.f32 %v625, %v625
  %v759 = vmul.f32 %v626, %v626
  %v760 = vmul.f32 %v627, %v627
  %v761 = vmul.f32 %v628, %v628
  %v762 = vmul.f32 %v629, %v629
  %v763 = vmul.f32 %v630, %v630
  %v764 = vmul.f32 %v631, %v631
  %v765 = vmul.f32 %v632, %v632
  %v766 = vmul.f32 %v633, %v633
  %v767 = vmul.f32 %v634, %v634
  %v768 = vmul.f32 %v635, %v635
  %v769 = vmul.f32 %v636, %v636
  %v770 = vmul.f32 %v637, %v637
  %v771 = vmul.f32 %v638, %v638
  %v772 = vmul.f32 %v639, %v639
  %v773 = vmul.f32 %v640, %v640
  %v774 = vmul.f32 %v641, %v641
  %v775 = vmul.f32 %v642, %v642
  %v776 = vmul.f32 %v643, %v643
  %v777 = vmul.f32 %v644, %v644
  %v778 = vmul.f32 %v645, %v645
  %v779 = vmul.f32 %v646, %v646
  %v780 = vmul.f32 %v647, %v647
  %v781 = vmul.f32 %v648, %v648
  %v782 = vmul.f32 %v649, %v649
  %v783 = vmul.f32 %v650, %v650
  %v784 = vmul.f32 %v651, %v651
  %v785 = vmul.f32 %v652, %v652
  %v786 = vmul.f32 %v653, %v653
  %v787 = vmul.f32 %v654, %v654
  %v788 = vmul.f32 %v655, %v655
  %v789 = vmul.f32 %v656, %v656
  %v790 = vmul.f32 %v657, %v657
  %v791 = vmul.f32 %v658, %v658
  %v792 = vmul.f32 %v659, %v659
  %v793 = vmul.f32 %v660, %v660
  %v794 = vmul.f32 %v661, %v661
  %v795 = vmul.f32 %v662, %v662
  %v796 = vmul.f32 %v663, %v663
  %v797 = vmul.f32 %v664, %v664
  %v798 = vmul.f32 %v665, %v665
  %v799 = vmul.f32 %v666, %v666
  %v800 = vmul.f32 %v667, %v667
  %v801 = vmul.f32 %v668, %v668
  %v802 = vmul.f32 %v669, %v669
  %v803 = vmul.f32 %v670, %v670
  %v804 = vmul.f32 %v671, %v671
  %v805 = vmul.f32 %v672, %v672
  %v806 = vmul.f32 %v673, %v673
  %v807 = vmul.f32 %v674, %v674
  %v808 = vmul.f32 %v675, %v675
  %v809 = vmul.f32 %v676, %v676
  %v810 = vmul.f32 %v677, %v677
  %v811 = vmul.f32 %v678, %v678
  %v812 = vmul.f32 %v679, %v679
  %v813 = vmul.f32 %v680, %v680
  %v814 = vmul.f32 %v681, %v681
  %v815 = vmul.f32 %v682, %v682
  %v816 = vmul.f32 %v683, %v683
  %v817 = vmul.f32 %v684, %v684
  %v818 = vmul.f32 %v685, %v685
  %v819 = vmul.f32 %v686, %v686
  %v820 = vadd.f32 %v756, %v757
  %v821 = vadd.f32 %v820, %v758
  %v822 = vadd.f32 %v821, %v759
  %v823 = vadd.f32 %v822, %v760
  %v824 = vadd.f32 %v823, %v761
  %v825 = vadd.f32 %v824, %v762
  %v826 = vadd.f32 %v825, %v763
  %v827 = vadd.f32 %v826, %v764
  %v828 = vadd.f32 %v827, %v765
  %v829 = vadd.f32 %v828, %v766
  %v830 = vadd.f32 %v829, %v767
  %v831 = vadd.f32 %v830, %v768
  %v832 = vadd.f32 %v831, %v769
  %v833 = vadd.f32 %v832, %v770
  %v834 = vadd.f32 %v833, %v771
  %v835 = vadd.f32 %v834, %v772
  %v836 = vadd.f32 %v835, %v773
  %v837 = vadd.f32 %v836, %v774
  %v838 = vadd.f32 %v837, %v775
  %v839 = vadd.f32 %v838, %v776
  %v840 = vadd.f32 %v839, %v777
  %v841 = vadd.f32 %v840, %v778
  %v842 = vadd.f32 %v841, %v779
  %v843 = vadd.f32 %v842, %v780
  %v844 = vadd.f32 %v843, %v781
  %v845 = vadd.f32 %v844, %v782
  %v846 = vadd.f32 %v845, %v783
  %v847 = vadd.f32 %v846, %v784
  %v848 = vadd.f32 %v847, %v785
  %v849 = vadd.f32 %v848, %v786
  %v850 = vadd.f32 %v849, %v787
  %v851 = vadd.f32 %v850, %v788
  %v852 = vadd.f32 %v851, %v789
  %v853 = vadd.f32 %v852, %v790
  %v854 = vadd.f32 %v853, %v791
  %v855 = vadd.f32 %v854, %v792
  %v856 = vadd.f32 %v855, %v793
  %v857 = vadd.f32 %v856, %v794
  %v858 = vadd.f32 %v857, %v795
  %v859 = vadd.f32 %v858, %v796
  %v860 = vadd.f32 %v859, %v797
  %v861 = vadd.f32 %v860, %v798
  %v862 = vadd.f32 %v861, %v799
  %v863 = vadd.f32 %v862, %v800
  %v864 = vadd.f32 %v863, %v801
  %v865 = vadd.f32 %v864, %v802
  %v866 = vadd.f32 %v865, %v803
  %v867 = vadd.f32 %v866, %v804
  %v868 = vadd.f32 %v867, %v805
  %v869 = vadd.f32 %v868, %v806
  %v870 = vadd.f32 %v869, %v807
  %v871 = vadd.f32 %v870, %v808
  %v872 = vadd.f32 %v871, %v809
  %v873 = vadd.f32 %v872, %v810
  %v874 = vadd.f32 %v873, %v811
  %v875 = vadd.f32 %v874, %v812
  %v876 = vadd.f32 %v875, %v813
  %v877 = vadd.f32 %v876, %v814
  %v878 = vadd.f32 %v877, %v815
  %v879 = vadd.f32 %v878, %v816
  %v880 = vadd.f32 %v879, %v817
  %v881 = vadd.f32 %v880, %v818
  %v882 = vadd.f32 %v881, %v819
  %v883 = vrot.slane %v882, 4
  %v884 = vadd.f32 %v882, %v883
  %v885 = vrot.slane %v884, 2
  %v886 = vadd.f32 %v884, %v885
  %v887 = vrot.slane %v886, 1
  %v888 = vadd.f32 %v886, %v887
  %889 = vst [vmem:[%s3] sm:$0x1] %v755
  %890 = vst [vmem:[%s3 + $0x1] sm:$0x1] %v888
  %v891 = vadd.f32 %v623, %v639
  %v892 = vadd.f32 %v624, %v640
  %v893 = vadd.f32 %v625, %v641
  %v894 = vadd.f32 %v626, %v642
  %v895 = vadd.f32 %v627, %v643
  %v896 = vadd.f32 %v628, %v644
  %v897 = vadd.f32 %v629, %v645
  %v898 = vadd.f32 %v630, %v646
  %v899 = vadd.f32 %v631, %v647
  %v900 = vadd.f32 %v632, %v648
  %v901 = vadd.f32 %v633, %v649
  %v902 = vadd.f32 %v634, %v650
  %v903 = vadd.f32 %v635, %v651
  %v904 = vadd.f32 %v636, %v652
  %v905 = vadd.f32 %v637, %v653
  %v906 = vadd.f32 %v638, %v654
  %v907 = vadd.f32 %v891, %v655
  %v908 = vadd.f32 %v892, %v656
  %v909 = vadd.f32 %v893, %v657
  %v910 = vadd.f32 %v894, %v658
  %v911 = vadd.f32 %v895, %v659
  %v912 = vadd.f32 %v896, %v660
  %v913 = vadd.f32 %v897, %v661
  %v914 = vadd.f32 %v898, %v662
  %v915 = vadd.f32 %v899, %v663
  %v916 = vadd.f32 %v900, %v664
  %v917 = vadd.f32 %v901, %v665
  %v918 = vadd.f32 %v902, %v666
  %v919 = vadd.f32 %v903, %v667
  %v920 = vadd.f32 %v904, %v668
  %v921 = vadd.f32 %v905, %v669
  %v922 = vadd.f32 %v906, %v670
  %v923 = vadd.f32 %v907, %v671
  %v924 = vadd.f32 %v908, %v672
  %v925 = vadd.f32 %v909, %v673
  %v926 = vadd.f32 %v910, %v674
  %v927 = vadd.f32 %v911, %v675
  %v928 = vadd.f32 %v912, %v676
  %v929 = vadd.f32 %v913, %v677
  %v930 = vadd.f32 %v914, %v678
  %v931 = vadd.f32 %v915, %v679
  %v932 = vadd.f32 %v916, %v680
  %v933 = vadd.f32 %v917, %v681
  %v934 = vadd.f32 %v918, %v682
  %v935 = vadd.f32 %v919, %v683
  %v936 = vadd.f32 %v920, %v684
  %v937 = vadd.f32 %v921, %v685
  %v938 = vadd.f32 %v922, %v686
  %v939 = vmul.f32 %v923, 0.25
  %v940 = vmul.f32 %v924, 0.25
  %v941 = vmul.f32 %v925, 0.25
  %v942 = vmul.f32 %v926, 0.25
  %v943 = vmul.f32 %v927, 0.25
  %v944 = vmul.f32 %v928, 0.25
  %v945 = vmul.f32 %v929, 0.25
  %v946 = vmul.f32 %v930, 0.25
  %v947 = vmul.f32 %v931, 0.25
  %v948 = vmul.f32 %v932, 0.25
  %v949 = vmul.f32 %v933, 0.25
  %v950 = vmul.f32 %v934, 0.25
  %v951 = vmul.f32 %v935, 0.25
  %v952 = vmul.f32 %v936, 0.25
  %v953 = vmul.f32 %v937, 0.25
  %v954 = vmul.f32 %v938, 0.25
  %955 = vst [vmem:[%s2] sm:$0xff] %v939
  %956 = vst [vmem:[%s2 + $0x8] sm:$0xff] %v940
  %957 = vst [vmem:[%s2 + $0x10] sm:$0xff] %v941
  %958 = vst [vmem:[%s2 + $0x18] sm:$0xff] %v942
  %959 = vst [vmem:[%s2 + $0x20] sm:$0xff] %v943
  %960 = vst [vmem:[%s2 + $0x28] sm:$0xff] %v944
  %961 = vst [vmem:[%s2 + $0x30] sm:$0xff] %v945
  %962 = vst [vmem:[%s2 + $0x38] sm:$0xff] %v946
  %963 = vst [vmem:[%s2 + $0x40] sm:$0xff] %v947
  %964 = vst [vmem:[%s2 + $0x48] sm:$0xff] %v948
  %965 = vst [vmem:[%s2 + $0x50] sm:$0xff] %v949
  %966 = vst [vmem:[%s2 + $0x58] sm:$0xff] %v950
  %967 = vst [vmem:[%s2 + $0x60] sm:$0xff] %v951
  %968 = vst [vmem:[%s2 + $0x68] sm:$0xff] %v952
  %969 = vst [vmem:[%s2 + $0x70] sm:$0xff] %v953
  %970 = vst [vmem:[%s2 + $0x78] sm:$0xff] %v954
  // Predicated region
  $region10: #{transition_layer.2} parent=0 // pred_check
    _
  $region11: #{transition_layer.2} parent=0 // pred_check_branch
    %972 = sbr.rel (0) target = $region13
  $region12: #{transition_layer.2} parent=0 // pred_region
    _
  $region13: #{transition_layer.2} parent=0 // pred_fallthru
    _
  // Predicated region
  $region14: #{transition_layer.2} parent=0 // pred_check
    _
  $region15: #{transition_layer.2} parent=0 // pred_check_branch
    %974 = sbr.rel (0) target = $region17
  $region16: #{transition_layer.2} parent=0 // pred_region
    _
  $region17: #{transition_layer.2} parent=0 // pred_fallthru
    _
  // Predicated region
  $region18: #{transition_layer.2} parent=0 // pred_check
    _
  $region19: #{transition_layer.2} parent=0 // pred_check_branch
    %976 = sbr.rel (0) target = $region21
  $region20: #{transition_layer.2} parent=0 // pred_region
    _
  $region21: #{transition_layer.2} parent=0 // pred_fallthru
    _
  // Predicated region
  $region22: #{transition_layer.2} parent=0 // pred_check
    _
  $region23: #{transition_layer.2} parent=0 // pred_check_branch
    %978 = sbr.rel (0) target = $region25
  $region24: #{transition_layer.2} parent=0 // pred_region
    _
  $region25: #{transition_layer.2} parent=0 // pred_fallthru
    _

</llo_original>
